<compile_context>
chip_gen: v7x
topology: tpu7x:2x2x1
jax: 0.10.0
libtpu: 0.0.40
codegen_flags: <defaults>
</compile_context>

<pallas_src>
import jax
import jax.numpy as jnp
from jax.experimental import pallas as pl
from jax.experimental.pallas import tpu as pltpu


# ---------------------------------------------------------------------------
# Kernel
# ---------------------------------------------------------------------------
def _disc_mlp_kernel(x_ref, cond_ref, w1a_ref, w1b_ref, b1_ref,
                     w2_ref, b2_ref, w3_ref, b3_ref, o_ref):
    """Fused 3-layer MLP with LeakyReLU(0.2); concat fused as a split matmul."""
    # ---- layer 1: concat([x, cond0]) @ W1  ==  x @ W1a + cond0 @ W1b --------
    x_bf = x_ref[...].astype(jnp.bfloat16)                    # (TM, F)   no-op if bf16 in
    c_bf = cond_ref[...].astype(jnp.bfloat16)                 # (TM, 512) no-op if bf16 in
    h1 = jnp.dot(x_bf, w1a_ref[...], preferred_element_type=jnp.float32)
    h1 = h1 + jnp.dot(c_bf, w1b_ref[...], preferred_element_type=jnp.float32)
    h1 = h1 + b1_ref[...]                                     # (TM, 128) f32
    h1 = jnp.where(h1 > 0, h1, 0.2 * h1)                      # LeakyReLU(0.2)

    # ---- layer 2 ------------------------------------------------------------
    h2 = jnp.dot(h1.astype(jnp.bfloat16), w2_ref[...],
                 preferred_element_type=jnp.float32)
    h2 = h2 + b2_ref[...]                                     # (TM, 64) f32
    h2 = jnp.where(h2 > 0, h2, 0.2 * h2)

    # ---- layer 3 (64 -> 1): VPU multiply + XLU lane reduce ------------------
    w3_row = w3_ref[...].astype(jnp.float32)                  # (1, 64)
    out = jnp.sum(h2 * w3_row, axis=-1, keepdims=True) + b3_ref[...]   # (TM, 1)
    o_ref[...] = out.astype(o_ref.dtype)


# ---------------------------------------------------------------------------
# Tile sizing / VMEM budgeting
# ---------------------------------------------------------------------------
def _round_up(n, m):
    return ((n + m - 1) // m) * m


def _chip_info():
    """Physical VMEM + dual-TensorCore heuristic. Conservative on failure."""
    try:
        vmem = int(pltpu.get_tpu_info().vmem_capacity_bytes)
    except Exception:  # pragma: no cover - AOT / mock / query failure
        vmem = 64 << 20
    dual_core = vmem <= (64 << 20)   # v7x: 64 MiB VMEM per TC, 2 TCs / chip
    return vmem, dual_core


def _vmem_limit_bytes(phys_vmem):
    """Explicit scoped-VMEM limit: 96 MiB on 128 MiB parts (v5e/v6e),
    48 MiB on 64 MiB parts (v7x) — always leaves compiler-scratch headroom."""
    return min(int(phys_vmem * 0.75), 96 << 20)


def _tile_vmem_bytes(tm, feature_dim, in_itemsize):
    """Estimated VMEM per grid step: double-buffered pipeline inputs/output,
    in-kernel temporaries (bf16 copies + f32 intermediates), resident weights."""
    c = 512
    pipe = 2 * tm * (feature_dim + c) * in_itemsize            # x + cond, x2 buffers
    pipe += 2 * tm * 128 * 4                                   # (tm,1) out, lane-padded, x2
    temps = tm * (feature_dim * 2 + c * 2                      # bf16 copies
                  + 128 * 4 + 128 * 2                          # h1 f32 + h1 bf16
                  + 64 * 4 + 128 * 4)                          # h2 f32 + out (padded)
    weights = 2 * ((feature_dim + c) * 128 * 2 + 128 * 64 * 2 + 4096)
    return pipe + temps + weights


def _pick_tile_m(batch, feature_dim, in_itemsize, vmem_limit, dual_core):
    budget = int(vmem_limit * 0.85)            # stay >=15% below the scoped limit
    tm = 8
    cand = 8
    while cand <= 4096:                        # 4096 rows is already DMA-amortized
        if _tile_vmem_bytes(cand, feature_dim, in_itemsize) <= budget:
            tm = cand
        cand *= 2
    if dual_core:
        # v7x megacore: guarantee >=2 grid steps so both TensorCores get work.
        tm = min(tm, _round_up(pl.cdiv(batch, 2), 8))
    # tiny batches: a single (padded) tile
    tm = min(tm, max(8, _round_up(batch, 8)))
    return max(tm, 8)


# ---------------------------------------------------------------------------
# Wrapper
# ---------------------------------------------------------------------------
def discriminator_forward(x, condition, params, mode=0):
    """JAX wrapper matching Discriminator.forward.

    x:         (B, feature_dim)  float32 or bfloat16
    condition: (B, T, 512)       float32 or bfloat16  (only [:, 0, :] is used)
    params:    dict of network1 weights (bf16) / biases (f32)
    """
    del mode  # both branches of the reference forward use network1

    B, F = x.shape
    _, T, C = condition.shape
    assert C == 512, "condition last dim must be 512"

    # Free, metadata-only reshape: the BlockSpec DMA picks columns [0, 512)
    # (== condition[:, 0, :]) directly from HBM — no strided-slice temporary.
    cond2d = condition.reshape(B, T * C)

    phys_vmem, dual_core = _chip_info()
    vmem_limit = _vmem_limit_bytes(phys_vmem)
    in_itemsize = max(x.dtype.itemsize, cond2d.dtype.itemsize)
    tm = _pick_tile_m(B, F, in_itemsize, vmem_limit, dual_core)
    grid = (pl.cdiv(B, tm),)

    weight_args = (params["w1a"], params["w1b"], params["b1"],
                   params["w2"], params["b2"], params["w3"], params["b3"])
    weight_bytes = sum(int(p.size) * p.dtype.itemsize for p in weight_args)
    flops = 2 * B * ((F + 512) * 128 + 128 * 64 + 64)
    bytes_accessed = (B * (F * x.dtype.itemsize + 512 * cond2d.dtype.itemsize + 4)
                      + weight_bytes)
    cost = pl.CostEstimate(flops=flops, transcendentals=0,
                           bytes_accessed=bytes_accessed)

    return pl.pallas_call(
        _disc_mlp_kernel,
        out_shape=jax.ShapeDtypeStruct((B, 1), jnp.float32),
        grid=grid,
        in_specs=[
            pl.BlockSpec((tm, F), lambda i: (i, 0)),       # x tile
            pl.BlockSpec((tm, C), lambda i: (i, 0)),       # condition[:, 0, :] tile
            pl.BlockSpec((F, 128), lambda i: (0, 0)),      # w1a (resident)
            pl.BlockSpec((C, 128), lambda i: (0, 0)),      # w1b (resident)
            pl.BlockSpec((1, 128), lambda i: (0, 0)),      # b1
            pl.BlockSpec((128, 64), lambda i: (0, 0)),     # w2
            pl.BlockSpec((1, 64), lambda i: (0, 0)),       # b2
            pl.BlockSpec((1, 64), lambda i: (0, 0)),       # w3 (row vector)
            pl.BlockSpec((1, 1), lambda i: (0, 0)),        # b3
        ],
        out_specs=pl.BlockSpec((tm, 1), lambda i: (i, 0)),
        compiler_params=pltpu.CompilerParams(
            dimension_semantics=("parallel",),
            vmem_limit_bytes=vmem_limit),
        cost_estimate=cost,
    )(x, cond2d, *weight_args)


# ---------------------------------------------------------------------------
# Parameter init (mimics nn.Linear uniform(+-1/sqrt(fan_in)))
# ---------------------------------------------------------------------------
def init_params(key, feature_dim):
    """network1 parameters only (network2 is never used in forward).

    Weights are stored transposed vs. PyTorch, i.e. (in_features, out_features),
    in bfloat16 (matmul input dtype); biases stay float32. The first layer's
    weight is split: w1a = rows [:feature_dim], w1b = rows [feature_dim:].
    """
    d_in = feature_dim + 512
    params = {}

    # layer 1 (split)
    key, kw, kb = jax.random.split(key, 3)
    bound = 1.0 / jnp.sqrt(d_in)
    w1_full = jax.random.uniform(kw, (d_in, 128), jnp.float32, -bound, bound)
    params["w1a"] = w1_full[:feature_dim, :].astype(jnp.bfloat16)
    params["w1b"] = w1_full[feature_dim:, :].astype(jnp.bfloat16)
    params["b1"] = jax.random.uniform(kb, (1, 128), jnp.float32, -bound, bound)

    # layer 2
    key, kw, kb = jax.random.split(key, 3)
    bound = 1.0 / jnp.sqrt(128)
    params["w2"] = jax.random.uniform(kw, (128, 64), jnp.float32,
                                      -bound, bound).astype(jnp.bfloat16)
    params["b2"] = jax.random.uniform(kb, (1, 64), jnp.float32, -bound, bound)

    # layer 3 (stored as a row vector for the VPU reduce)
    key, kw, kb = jax.random.split(key, 3)
    bound = 1.0 / jnp.sqrt(64)
    params["w3"] = jax.random.uniform(kw, (1, 64), jnp.float32,
                                      -bound, bound).astype(jnp.bfloat16)
    params["b3"] = jax.random.uniform(kb, (1, 1), jnp.float32, -bound, bound)
    return params


# ---------------------------------------------------------------------------
# Plain-JAX reference (same bf16-input / f32-accumulate recipe as the kernel)
# ---------------------------------------------------------------------------
def _reference_forward(x, condition, params):
    c0 = condition[:, 0, :]
    h1 = (jnp.dot(x.astype(jnp.bfloat16), params["w1a"],
                  preferred_element_type=jnp.float32)
          + jnp.dot(c0.astype(jnp.bfloat16), params["w1b"],
                    preferred_element_type=jnp.float32)
          + params["b1"])
    h1 = jnp.where(h1 > 0, h1, 0.2 * h1)
    h2 = jnp.dot(h1.astype(jnp.bfloat16), params["w2"],
                 preferred_element_type=jnp.float32) + params["b2"]
    h2 = jnp.where(h2 > 0, h2, 0.2 * h2)
    return (jnp.sum(h2 * params["w3"].astype(jnp.float32),
                    axis=-1, keepdims=True) + params["b3"])


if __name__ == "__main__":
    key = jax.random.PRNGKey(0)

    feature_dim = 32     # small synthetic feature_dim
    batch = 8
    seq = 4              # condition has shape (B, seq, 512); only [:, 0, :] used

    kp, kx, kc = jax.random.split(key, 3)
    params = init_params(kp, feature_dim)
    x = jax.random.normal(kx, (batch, feature_dim), jnp.float32)
    condition = jax.random.normal(kc, (batch, seq, 512), jnp.float32)

    out = discriminator_forward(x, condition, params, mode=0)
    out = jax.block_until_ready(out)

    ref = _reference_forward(x, condition, params)
    assert out.shape == (batch, 1)
    assert jnp.allclose(out, ref, atol=1e-3, rtol=1e-3), (
        f"max abs diff {jnp.max(jnp.abs(out - ref))}")

    print("KERNEL_OK")
</pallas_src>

<mosaic_0001>
module attributes {stable_mosaic.version = 11 : i64} {
  func.func @_disc_mlp_kernel(%arg0: i32, %arg1: memref<8x32xf32, #tpu.memory_space<vmem>>, %arg2: memref<8x512xf32, #tpu.memory_space<vmem>>, %arg3: memref<32x128xbf16, #tpu.memory_space<vmem>>, %arg4: memref<512x128xbf16, #tpu.memory_space<vmem>>, %arg5: memref<1x128xf32, #tpu.memory_space<vmem>>, %arg6: memref<128x64xbf16, #tpu.memory_space<vmem>>, %arg7: memref<1x64xf32, #tpu.memory_space<vmem>>, %arg8: memref<1x64xbf16, #tpu.memory_space<vmem>>, %arg9: memref<1x1xf32, #tpu.memory_space<vmem>>, %arg10: memref<8x1xf32, #tpu.memory_space<vmem>>) attributes {dimension_semantics = [#tpu.dimension_semantics<parallel>], iteration_bounds = array<i64: 1>, scalar_prefetch = 0 : i64, scratch_operands = 0 : i64, tpu.core_type = #tpu.core_type<tc>, window_params = [{transform_indices = @transform_0, window_bounds = array<i64: 8, 32>}, {transform_indices = @transform_1, window_bounds = array<i64: 8, 512>}, {pipeline_mode = #tpu.pipeline_mode<synchronous>, transform_indices = @transform_2, window_bounds = array<i64: 32, 128>}, {pipeline_mode = #tpu.pipeline_mode<synchronous>, transform_indices = @transform_3, window_bounds = array<i64: 512, 128>}, {pipeline_mode = #tpu.pipeline_mode<synchronous>, transform_indices = @transform_4, window_bounds = array<i64: 1, 128>}, {pipeline_mode = #tpu.pipeline_mode<synchronous>, transform_indices = @transform_5, window_bounds = array<i64: 128, 64>}, {pipeline_mode = #tpu.pipeline_mode<synchronous>, transform_indices = @transform_6, window_bounds = array<i64: 1, 64>}, {pipeline_mode = #tpu.pipeline_mode<synchronous>, transform_indices = @transform_7, window_bounds = array<i64: 1, 64>}, {pipeline_mode = #tpu.pipeline_mode<synchronous>, transform_indices = @transform_8, window_bounds = array<i64: 1, 1>}, {transform_indices = @transform_9, window_bounds = array<i64: 8, 1>}]} {
    %c0 = arith.constant 0 : index
    %c0_0 = arith.constant 0 : index
    %0 = vector.load %arg1[%c0, %c0_0] : memref<8x32xf32, #tpu.memory_space<vmem>>, vector<8x32xf32>
    %1 = arith.truncf %0 : vector<8x32xf32> to vector<8x32xbf16>
    %c0_1 = arith.constant 0 : index
    %c0_2 = arith.constant 0 : index
    %2 = vector.load %arg2[%c0_1, %c0_2] : memref<8x512xf32, #tpu.memory_space<vmem>>, vector<8x512xf32>
    %3 = arith.truncf %2 : vector<8x512xf32> to vector<8x512xbf16>
    %c0_3 = arith.constant 0 : index
    %c0_4 = arith.constant 0 : index
    %4 = vector.load %arg3[%c0_3, %c0_4] : memref<32x128xbf16, #tpu.memory_space<vmem>>, vector<32x128xbf16>
    %cst = arith.constant dense<0.000000e+00> : vector<8x128xf32>
    %5 = tpu.matmul %1, %4, %cst {dimension_numbers = #tpu.dot_dimension_numbers<[1], [0], [0], [1], [0, 0, 1, 1], [], []>} : vector<8x32xbf16>, vector<32x128xbf16>, vector<8x128xf32> -> vector<8x128xf32>
    %c0_5 = arith.constant 0 : index
    %c0_6 = arith.constant 0 : index
    %6 = vector.load %arg4[%c0_5, %c0_6] : memref<512x128xbf16, #tpu.memory_space<vmem>>, vector<512x128xbf16>
    %cst_7 = arith.constant dense<0.000000e+00> : vector<8x128xf32>
    %7 = tpu.matmul %3, %6, %cst_7 {dimension_numbers = #tpu.dot_dimension_numbers<[1], [0], [0], [1], [0, 0, 1, 1], [], []>} : vector<8x512xbf16>, vector<512x128xbf16>, vector<8x128xf32> -> vector<8x128xf32>
    %8 = arith.addf %5, %7 : vector<8x128xf32>
    %c0_8 = arith.constant 0 : index
    %c0_9 = arith.constant 0 : index
    %9 = vector.load %arg5[%c0_8, %c0_9] : memref<1x128xf32, #tpu.memory_space<vmem>>, vector<1x128xf32>
    %10 = vector.broadcast %9 : vector<1x128xf32> to vector<8x128xf32>
    %11 = arith.addf %8, %10 : vector<8x128xf32>
    %cst_10 = arith.constant 0.000000e+00 : f32
    %12 = vector.broadcast %cst_10 : f32 to vector<8x128xf32>
    %13 = arith.cmpf ogt, %11, %12 : vector<8x128xf32>
    %cst_11 = arith.constant 2.000000e-01 : f32
    %14 = vector.broadcast %cst_11 : f32 to vector<8x128xf32>
    %15 = arith.mulf %14, %11 : vector<8x128xf32>
    %16 = arith.select %13, %11, %15 : vector<8x128xi1>, vector<8x128xf32>
    %17 = arith.truncf %16 : vector<8x128xf32> to vector<8x128xbf16>
    %c0_12 = arith.constant 0 : index
    %c0_13 = arith.constant 0 : index
    %18 = vector.load %arg6[%c0_12, %c0_13] : memref<128x64xbf16, #tpu.memory_space<vmem>>, vector<128x64xbf16>
    %cst_14 = arith.constant dense<0.000000e+00> : vector<8x64xf32>
    %19 = tpu.matmul %17, %18, %cst_14 {dimension_numbers = #tpu.dot_dimension_numbers<[1], [0], [0], [1], [0, 0, 1, 1], [], []>} : vector<8x128xbf16>, vector<128x64xbf16>, vector<8x64xf32> -> vector<8x64xf32>
    %c0_15 = arith.constant 0 : index
    %c0_16 = arith.constant 0 : index
    %20 = vector.load %arg7[%c0_15, %c0_16] : memref<1x64xf32, #tpu.memory_space<vmem>>, vector<1x64xf32>
    %21 = vector.broadcast %20 : vector<1x64xf32> to vector<8x64xf32>
    %22 = arith.addf %19, %21 : vector<8x64xf32>
    %cst_17 = arith.constant 0.000000e+00 : f32
    %23 = vector.broadcast %cst_17 : f32 to vector<8x64xf32>
    %24 = arith.cmpf ogt, %22, %23 : vector<8x64xf32>
    %cst_18 = arith.constant 2.000000e-01 : f32
    %25 = vector.broadcast %cst_18 : f32 to vector<8x64xf32>
    %26 = arith.mulf %25, %22 : vector<8x64xf32>
    %27 = arith.select %24, %22, %26 : vector<8x64xi1>, vector<8x64xf32>
    %c0_19 = arith.constant 0 : index
    %c0_20 = arith.constant 0 : index
    %28 = vector.load %arg8[%c0_19, %c0_20] : memref<1x64xbf16, #tpu.memory_space<vmem>>, vector<1x64xbf16>
    %29 = arith.extf %28 : vector<1x64xbf16> to vector<1x64xf32>
    %30 = vector.broadcast %29 : vector<1x64xf32> to vector<8x64xf32>
    %31 = arith.mulf %27, %30 : vector<8x64xf32>
    %cst_21 = arith.constant dense<0.000000e+00> : vector<8xf32>
    %32 = vector.multi_reduction <add>, %31, %cst_21 [1] : vector<8x64xf32> to vector<8xf32>
    %33 = vector.shape_cast %32 : vector<8xf32> to vector<8x1xf32>
    %c0_22 = arith.constant 0 : index
    %c0_23 = arith.constant 0 : index
    %34 = vector.load %arg9[%c0_22, %c0_23] : memref<1x1xf32, #tpu.memory_space<vmem>>, vector<1x1xf32>
    %35 = vector.broadcast %34 : vector<1x1xf32> to vector<8x1xf32>
    %36 = arith.addf %33, %35 : vector<8x1xf32>
    %c0_24 = arith.constant 0 : index
    %c0_25 = arith.constant 0 : index
    %37 = vector.load %arg10[%c0_24, %c0_25] : memref<8x1xf32, #tpu.memory_space<vmem>>, vector<8x1xf32>
    tpu.vector_store %arg10[%c0_24, %c0_25], %36 {strides = array<i32>} : memref<8x1xf32, #tpu.memory_space<vmem>>, vector<8x1xf32>,
    return
  }
  func.func @transform_0(%arg0: i32) -> (i32, i32) {
    %c0_i32 = arith.constant 0 : i32
    %c0_i32_0 = arith.constant 0 : i32
    return %arg0, %c0_i32 : i32, i32
  }
  func.func @transform_1(%arg0: i32) -> (i32, i32) {
    %c0_i32 = arith.constant 0 : i32
    %c0_i32_0 = arith.constant 0 : i32
    return %arg0, %c0_i32 : i32, i32
  }
  func.func @transform_2(%arg0: i32) -> (i32, i32) {
    %c0_i32 = arith.constant 0 : i32
    %c0_i32_0 = arith.constant 0 : i32
    %c0_i32_1 = arith.constant 0 : i32
    return %c0_i32, %c0_i32_0 : i32, i32
  }
  func.func @transform_3(%arg0: i32) -> (i32, i32) {
    %c0_i32 = arith.constant 0 : i32
    %c0_i32_0 = arith.constant 0 : i32
    %c0_i32_1 = arith.constant 0 : i32
    return %c0_i32, %c0_i32_0 : i32, i32
  }
  func.func @transform_4(%arg0: i32) -> (i32, i32) {
    %c0_i32 = arith.constant 0 : i32
    %c0_i32_0 = arith.constant 0 : i32
    %c0_i32_1 = arith.constant 0 : i32
    return %c0_i32, %c0_i32_0 : i32, i32
  }
  func.func @transform_5(%arg0: i32) -> (i32, i32) {
    %c0_i32 = arith.constant 0 : i32
    %c0_i32_0 = arith.constant 0 : i32
    %c0_i32_1 = arith.constant 0 : i32
    return %c0_i32, %c0_i32_0 : i32, i32
  }
  func.func @transform_6(%arg0: i32) -> (i32, i32) {
    %c0_i32 = arith.constant 0 : i32
    %c0_i32_0 = arith.constant 0 : i32
    %c0_i32_1 = arith.constant 0 : i32
    return %c0_i32, %c0_i32_0 : i32, i32
  }
  func.func @transform_7(%arg0: i32) -> (i32, i32) {
    %c0_i32 = arith.constant 0 : i32
    %c0_i32_0 = arith.constant 0 : i32
    %c0_i32_1 = arith.constant 0 : i32
    return %c0_i32, %c0_i32_0 : i32, i32
  }
  func.func @transform_8(%arg0: i32) -> (i32, i32) {
    %c0_i32 = arith.constant 0 : i32
    %c0_i32_0 = arith.constant 0 : i32
    %c0_i32_1 = arith.constant 0 : i32
    return %c0_i32, %c0_i32_0 : i32, i32
  }
  func.func @transform_9(%arg0: i32) -> (i32, i32) {
    %c0_i32 = arith.constant 0 : i32
    %c0_i32_0 = arith.constant 0 : i32
    return %arg0, %c0_i32 : i32, i32
  }
}

</mosaic_0001>

<llo_original>
// kernel: tpu_custom_call.1
$region0: #{tpu_custom_call.1}
  #allocation0 [shape = 'u32[]', space=smem, size = 0x4, offset = 0x4, fixed_abs, tag = 'smem constant byte address 0x4 - core index']
  #allocation1 [shape = 'u32[144,128]{1,0:T(1,128)}', space=vmem, size = 0x12000, scoped, tag = 'internal scratch']
  #allocation2 [shape = 'f32[1,1]{1,0:T(1,128)S(1)}', space=vmem, size = 0x200, scoped, tag = 'scoped memory for tpu_custom_call.1']
  %s0 = inlined_call_operand.vmem [shape: f32[8,32], index: 0, kind: input, shape index: {}]
  %s1 = inlined_call_operand.hbm [shape: f32[8,2048], index: 1, kind: input, shape index: {}]
  %s2 = inlined_call_operand.vmem [shape: bf16[32,128], index: 2, kind: input, shape index: {}]
  %s3 = inlined_call_operand.hbm [shape: bf16[512,128], index: 3, kind: input, shape index: {}]
  %s4 = inlined_call_operand.vmem [shape: f32[1,128], index: 4, kind: input, shape index: {}]
  %s5 = inlined_call_operand.vmem [shape: bf16[128,64], index: 5, kind: input, shape index: {}]
  %s6 = inlined_call_operand.vmem [shape: f32[1,64], index: 6, kind: input, shape index: {}]
  %s7 = inlined_call_operand.vmem [shape: bf16[1,64], index: 7, kind: input, shape index: {}]
  %s8 = inlined_call_operand.<no memory space> [shape: f32[1,1], index: 8, kind: input, shape index: {}]
  %s9 = inlined_call_operand.vmem [shape: f32[8,1], index: 9, kind: output, shape index: {}]
  %s10 = sld [smem:[#allocation0]]
  $region54: #{tpu_custom_call.1} parent=0
    _
  %s12 = ssub.s32 1, %s10
  %s13 = scalar_select 0, %s12, %s10
  %v14 = vstv %s8
  %15 = vst [vmem:[#allocation2] sm:$0x1] %v14
  $region1: #{tpu_custom_call.1} parent=0
    #allocation3 [shape = 'u8[16384]{0}', space=vmem, size = 0x4000, scoped, tag = 'input window, operand 1, single buffered']
    #allocation4 [shape = 's32[1]{0}', space=sflag, size = 0x4, scoped, tag = 'scoped memory for tpu_custom_call.1']
    #allocation5 [shape = 'u8[131072]{0}', space=vmem, size = 0x20000, scoped, tag = 'input window, operand 3, single buffered']
    #allocation6 [shape = 's32[1]{0}', space=sflag, size = 0x4, scoped, tag = 'scoped memory for tpu_custom_call.1']
    %16 = vsyncpa [#allocation4], 0
    %17 = vsyncpa [#allocation6], 0
    // Predicated region
    $region2: #{tpu_custom_call.1} parent=1 // pred_check
      _
    $region3: #{tpu_custom_call.1} parent=1 // pred_check_branch
      %19 = sbr.rel (0) target = $region5
    $region4: #{tpu_custom_call.1} parent=1 // pred_region
      _
    $region5: #{tpu_custom_call.1} parent=1 // pred_fallthru
      _
    // Predicated region
    $region6: #{tpu_custom_call.1} parent=1 // pred_check
      _
    $region7: #{tpu_custom_call.1} parent=1 // pred_check_branch
      %21 = sbr.rel (0) target = $region9
    $region8: #{tpu_custom_call.1} parent=1 // pred_region
      %s23 = ssub.s32 512, 512
      %24 = vsyncadd [#allocation4], %s23
      %s26 = sshll.u32 [#allocation3], 4
      %s27 = int_to_ptr.vmem [resolvable:$true] %s26
      %29 = dma.hbm_to_vmem [thread:$0]  %s1, 512, %s27, [#allocation4]
    $region9: #{tpu_custom_call.1} parent=1 // pred_fallthru
      _
    // Predicated region
    $region10: #{tpu_custom_call.1} parent=1 // pred_check
      _
    $region11: #{tpu_custom_call.1} parent=1 // pred_check_branch
      %31 = sbr.rel (0) target = $region13
    $region12: #{tpu_custom_call.1} parent=1 // pred_region
      _
    $region13: #{tpu_custom_call.1} parent=1 // pred_fallthru
      _
    // Predicated region
    $region14: #{tpu_custom_call.1} parent=1 // pred_check
      _
    $region15: #{tpu_custom_call.1} parent=1 // pred_check_branch
      %33 = sbr.rel (0) target = $region17
    $region16: #{tpu_custom_call.1} parent=1 // pred_region
      %s35 = ssub.s32 4096, 4096
      %36 = vsyncadd [#allocation6], %s35
      %s37 = sshll.u32 [#allocation5], 4
      %s38 = int_to_ptr.vmem [resolvable:$true] %s37
      %43 = dma.hbm_to_vmem [thread:$0]  %s3, 4096, %s38, [#allocation6], 64, 64, 4
    $region17: #{tpu_custom_call.1} parent=1 // pred_fallthru
      _
    // Predicated region
    $region18: #{tpu_custom_call.1} parent=1 // pred_check
      _
    $region19: #{tpu_custom_call.1} parent=1 // pred_check_branch
      %45 = sbr.rel (0) target = $region21
    $region20: #{tpu_custom_call.1} parent=1 // pred_region
      _
    $region21: #{tpu_custom_call.1} parent=1 // pred_fallthru
      _
    // Predicated region
    $region22: #{tpu_custom_call.1} parent=1 // pred_check
      _
    $region23: #{tpu_custom_call.1} parent=1 // pred_check_branch
      %47 = sbr.rel (0) target = $region25
    $region24: #{tpu_custom_call.1} parent=1 // pred_region
      _
    $region25: #{tpu_custom_call.1} parent=1 // pred_fallthru
      _
    // Predicated region
    $region26: #{tpu_custom_call.1} parent=1 // pred_check
      _
    $region27: #{tpu_custom_call.1} parent=1 // pred_check_branch
      %49 = sbr.rel (0) target = $region29
    $region28: #{tpu_custom_call.1} parent=1 // pred_region
      _
    $region29: #{tpu_custom_call.1} parent=1 // pred_fallthru
      _
    // Predicated region
    $region30: #{tpu_custom_call.1} parent=1 // pred_check
      _
    $region31: #{tpu_custom_call.1} parent=1 // pred_check_branch
      %51 = sbr.rel (0) target = $region33
    $region32: #{tpu_custom_call.1} parent=1 // pred_region
      _
    $region33: #{tpu_custom_call.1} parent=1 // pred_fallthru
      _
    // Predicated region
    $region34: #{tpu_custom_call.1} parent=1 // pred_check
      _
    $region35: #{tpu_custom_call.1} parent=1 // pred_check_branch
      %53 = sbr.rel (0) target = $region37
    $region36: #{tpu_custom_call.1} parent=1 // pred_region
      _
    $region37: #{tpu_custom_call.1} parent=1 // pred_fallthru
      _
    // Predicated region
    $region38: #{tpu_custom_call.1} parent=1 // pred_check
      _
    $region39: #{tpu_custom_call.1} parent=1 // pred_check_branch
      %55 = sbr.rel (0) target = $region41
    $region40: #{tpu_custom_call.1} parent=1 // pred_region
      %56 = dma.done [#allocation4], 512
    $region41: #{tpu_custom_call.1} parent=1 // pred_fallthru
      _
    // Predicated region
    $region42: #{tpu_custom_call.1} parent=1 // pred_check
      _
    $region43: #{tpu_custom_call.1} parent=1 // pred_check_branch
      %58 = sbr.rel (0) target = $region45
    $region44: #{tpu_custom_call.1} parent=1 // pred_region
      %59 = dma.done [#allocation6], 4096
    $region45: #{tpu_custom_call.1} parent=1 // pred_fallthru
      _
    %v61 = vld [vmem:[%s0] sm:$0xff]
    %v62 = vpack.c.bf16 %v61, %v61
    %v63 = vld [vmem:[#allocation3] sm:$0xff]
    %v64 = vld [vmem:[#allocation3 + $0x8] sm:$0xff]
    %v65 = vld [vmem:[#allocation3 + $0x10] sm:$0xff]
    %v66 = vld [vmem:[#allocation3 + $0x18] sm:$0xff]
    %v67 = vpack.c.bf16 %v63, %v63
    %v68 = vpack.c.bf16 %v64, %v64
    %v69 = vpack.c.bf16 %v65, %v65
    %v70 = vpack.c.bf16 %v66, %v66
    %v71 = vld [vmem:[%s2] sm:$0xf]
    %v72 = vld [vmem:[%s2 + $0x4] sm:$0xf]
    %v73 = vld [vmem:[%s2 + $0x8] sm:$0xf]
    %v74 = vld [vmem:[%s2 + $0xc] sm:$0xf]
    %v75 = vld [vmem:[#allocation5] sm:$0xf]
    %v76 = vld [vmem:[#allocation5 + $0x4] sm:$0xf]
    %v77 = vld [vmem:[#allocation5 + $0x8] sm:$0xf]
    %v78 = vld [vmem:[#allocation5 + $0xc] sm:$0xf]
    %v79 = vld [vmem:[#allocation5 + $0x10] sm:$0xf]
    %v80 = vld [vmem:[#allocation5 + $0x14] sm:$0xf]
    %v81 = vld [vmem:[#allocation5 + $0x18] sm:$0xf]
    %v82 = vld [vmem:[#allocation5 + $0x1c] sm:$0xf]
    %v83 = vld [vmem:[#allocation5 + $0x20] sm:$0xf]
    %v84 = vld [vmem:[#allocation5 + $0x24] sm:$0xf]
    %v85 = vld [vmem:[#allocation5 + $0x28] sm:$0xf]
    %v86 = vld [vmem:[#allocation5 + $0x2c] sm:$0xf]
    %v87 = vld [vmem:[#allocation5 + $0x30] sm:$0xf]
    %v88 = vld [vmem:[#allocation5 + $0x34] sm:$0xf]
    %v89 = vld [vmem:[#allocation5 + $0x38] sm:$0xf]
    %v90 = vld [vmem:[#allocation5 + $0x3c] sm:$0xf]
    %v91 = vld [vmem:[#allocation5 + $0x40] sm:$0xf]
    %v92 = vld [vmem:[#allocation5 + $0x44] sm:$0xf]
    %v93 = vld [vmem:[#allocation5 + $0x48] sm:$0xf]
    %v94 = vld [vmem:[#allocation5 + $0x4c] sm:$0xf]
    %v95 = vld [vmem:[#allocation5 + $0x50] sm:$0xf]
    %v96 = vld [vmem:[#allocation5 + $0x54] sm:$0xf]
    %v97 = vld [vmem:[#allocation5 + $0x58] sm:$0xf]
    %v98 = vld [vmem:[#allocation5 + $0x5c] sm:$0xf]
    %v99 = vld [vmem:[#allocation5 + $0x60] sm:$0xf]
    %v100 = vld [vmem:[#allocation5 + $0x64] sm:$0xf]
    %v101 = vld [vmem:[#allocation5 + $0x68] sm:$0xf]
    %v102 = vld [vmem:[#allocation5 + $0x6c] sm:$0xf]
    %v103 = vld [vmem:[#allocation5 + $0x70] sm:$0xf]
    %v104 = vld [vmem:[#allocation5 + $0x74] sm:$0xf]
    %v105 = vld [vmem:[#allocation5 + $0x78] sm:$0xf]
    %v106 = vld [vmem:[#allocation5 + $0x7c] sm:$0xf]
    %v107 = vld [vmem:[#allocation5 + $0x80] sm:$0xf]
    %v108 = vld [vmem:[#allocation5 + $0x84] sm:$0xf]
    %v109 = vld [vmem:[#allocation5 + $0x88] sm:$0xf]
    %v110 = vld [vmem:[#allocation5 + $0x8c] sm:$0xf]
    %v111 = vld [vmem:[#allocation5 + $0x90] sm:$0xf]
    %v112 = vld [vmem:[#allocation5 + $0x94] sm:$0xf]
    %v113 = vld [vmem:[#allocation5 + $0x98] sm:$0xf]
    %v114 = vld [vmem:[#allocation5 + $0x9c] sm:$0xf]
    %v115 = vld [vmem:[#allocation5 + $0xa0] sm:$0xf]
    %v116 = vld [vmem:[#allocation5 + $0xa4] sm:$0xf]
    %v117 = vld [vmem:[#allocation5 + $0xa8] sm:$0xf]
    %v118 = vld [vmem:[#allocation5 + $0xac] sm:$0xf]
    %v119 = vld [vmem:[#allocation5 + $0xb0] sm:$0xf]
    %v120 = vld [vmem:[#allocation5 + $0xb4] sm:$0xf]
    %v121 = vld [vmem:[#allocation5 + $0xb8] sm:$0xf]
    %v122 = vld [vmem:[#allocation5 + $0xbc] sm:$0xf]
    %v123 = vld [vmem:[#allocation5 + $0xc0] sm:$0xf]
    %v124 = vld [vmem:[#allocation5 + $0xc4] sm:$0xf]
    %v125 = vld [vmem:[#allocation5 + $0xc8] sm:$0xf]
    %v126 = vld [vmem:[#allocation5 + $0xcc] sm:$0xf]
    %v127 = vld [vmem:[#allocation5 + $0xd0] sm:$0xf]
    %v128 = vld [vmem:[#allocation5 + $0xd4] sm:$0xf]
    %v129 = vld [vmem:[#allocation5 + $0xd8] sm:$0xf]
    %v130 = vld [vmem:[#allocation5 + $0xdc] sm:$0xf]
    %v131 = vld [vmem:[#allocation5 + $0xe0] sm:$0xf]
    %v132 = vld [vmem:[#allocation5 + $0xe4] sm:$0xf]
    %v133 = vld [vmem:[#allocation5 + $0xe8] sm:$0xf]
    %v134 = vld [vmem:[#allocation5 + $0xec] sm:$0xf]
    %v135 = vld [vmem:[#allocation5 + $0xf0] sm:$0xf]
    %v136 = vld [vmem:[#allocation5 + $0xf4] sm:$0xf]
    %v137 = vld [vmem:[#allocation5 + $0xf8] sm:$0xf]
    %v138 = vld [vmem:[#allocation5 + $0xfc] sm:$0xf]
    %v203 = vunpack.c.l.b16 %v75
    %v204 = vunpack.c.l.b16 %v76
    %v205 = vunpack.c.l.b16 %v77
    %v206 = vunpack.c.l.b16 %v78
    %v207 = vunpack.c.l.b16 %v79
    %v208 = vunpack.c.l.b16 %v80
    %v209 = vunpack.c.l.b16 %v81
    %v210 = vunpack.c.l.b16 %v82
    %v211 = vunpack.c.l.b16 %v83
    %v212 = vunpack.c.l.b16 %v84
    %v213 = vunpack.c.l.b16 %v85
    %v214 = vunpack.c.l.b16 %v86
    %v215 = vunpack.c.l.b16 %v87
    %v216 = vunpack.c.l.b16 %v88
    %v217 = vunpack.c.l.b16 %v89
    %v218 = vunpack.c.l.b16 %v90
    %v219 = vunpack.c.l.b16 %v91
    %v220 = vunpack.c.l.b16 %v92
    %v221 = vunpack.c.l.b16 %v93
    %v222 = vunpack.c.l.b16 %v94
    %v223 = vunpack.c.l.b16 %v95
    %v224 = vunpack.c.l.b16 %v96
    %v225 = vunpack.c.l.b16 %v97
    %v226 = vunpack.c.l.b16 %v98
    %v227 = vunpack.c.l.b16 %v99
    %v228 = vunpack.c.l.b16 %v100
    %v229 = vunpack.c.l.b16 %v101
    %v230 = vunpack.c.l.b16 %v102
    %v231 = vunpack.c.l.b16 %v103
    %v232 = vunpack.c.l.b16 %v104
    %v233 = vunpack.c.l.b16 %v105
    %v234 = vunpack.c.l.b16 %v106
    %v235 = vunpack.c.l.b16 %v107
    %v236 = vunpack.c.l.b16 %v108
    %v237 = vunpack.c.l.b16 %v109
    %v238 = vunpack.c.l.b16 %v110
    %v239 = vunpack.c.l.b16 %v111
    %v240 = vunpack.c.l.b16 %v112
    %v241 = vunpack.c.l.b16 %v113
    %v242 = vunpack.c.l.b16 %v114
    %v243 = vunpack.c.l.b16 %v115
    %v244 = vunpack.c.l.b16 %v116
    %v245 = vunpack.c.l.b16 %v117
    %v246 = vunpack.c.l.b16 %v118
    %v247 = vunpack.c.l.b16 %v119
    %v248 = vunpack.c.l.b16 %v120
    %v249 = vunpack.c.l.b16 %v121
    %v250 = vunpack.c.l.b16 %v122
    %v251 = vunpack.c.l.b16 %v123
    %v252 = vunpack.c.l.b16 %v124
    %v253 = vunpack.c.l.b16 %v125
    %v254 = vunpack.c.l.b16 %v126
    %v255 = vunpack.c.l.b16 %v127
    %v256 = vunpack.c.l.b16 %v128
    %v257 = vunpack.c.l.b16 %v129
    %v258 = vunpack.c.l.b16 %v130
    %v259 = vunpack.c.l.b16 %v131
    %v260 = vunpack.c.l.b16 %v132
    %v261 = vunpack.c.l.b16 %v133
    %v262 = vunpack.c.l.b16 %v134
    %v263 = vunpack.c.l.b16 %v135
    %v264 = vunpack.c.l.b16 %v136
    %v265 = vunpack.c.l.b16 %v137
    %v266 = vunpack.c.l.b16 %v138
    %v267 = vpack.c.b16 %v204, %v203
    %v268 = vpack.c.b16 %v206, %v205
    %v269 = vpack.c.b16 %v208, %v207
    %v270 = vpack.c.b16 %v210, %v209
    %v271 = vpack.c.b16 %v212, %v211
    %v272 = vpack.c.b16 %v214, %v213
    %v273 = vpack.c.b16 %v216, %v215
    %v274 = vpack.c.b16 %v218, %v217
    %v275 = vpack.c.b16 %v220, %v219
    %v276 = vpack.c.b16 %v222, %v221
    %v277 = vpack.c.b16 %v224, %v223
    %v278 = vpack.c.b16 %v226, %v225
    %v279 = vpack.c.b16 %v228, %v227
    %v280 = vpack.c.b16 %v230, %v229
    %v281 = vpack.c.b16 %v232, %v231
    %v282 = vpack.c.b16 %v234, %v233
    %v283 = vpack.c.b16 %v236, %v235
    %v284 = vpack.c.b16 %v238, %v237
    %v285 = vpack.c.b16 %v240, %v239
    %v286 = vpack.c.b16 %v242, %v241
    %v287 = vpack.c.b16 %v244, %v243
    %v288 = vpack.c.b16 %v246, %v245
    %v289 = vpack.c.b16 %v248, %v247
    %v290 = vpack.c.b16 %v250, %v249
    %v291 = vpack.c.b16 %v252, %v251
    %v292 = vpack.c.b16 %v254, %v253
    %v293 = vpack.c.b16 %v256, %v255
    %v294 = vpack.c.b16 %v258, %v257
    %v295 = vpack.c.b16 %v260, %v259
    %v296 = vpack.c.b16 %v262, %v261
    %v297 = vpack.c.b16 %v264, %v263
    %v298 = vpack.c.b16 %v266, %v265
    %331 = vmatprep.subr.bf16.mxu0 0
    %332 = vmatpush1.bf16.msra.mxu0 %v267
    %333 = vmatprep.subr.bf16.mxu0 0
    %334 = vmatpush1.bf16.msra.mxu0 %v268
    %335 = vmatprep.subr.bf16.mxu0 0
    %336 = vmatpush1.bf16.msra.mxu0 %v269
    %337 = vmatprep.subr.bf16.mxu0 0
    %338 = vmatpush1.bf16.msra.mxu0 %v270
    %339 = vmatprep.subr.bf16.mxu0 0
    %340 = vmatpush1.bf16.msra.mxu0 %v271
    %341 = vmatprep.subr.bf16.mxu0 0
    %342 = vmatpush1.bf16.msra.mxu0 %v272
    %343 = vmatprep.subr.bf16.mxu0 0
    %344 = vmatpush1.bf16.msra.mxu0 %v273
    %345 = vmatprep.subr.bf16.mxu0 0
    %346 = vmatpush1.bf16.msra.mxu0 %v274
    %347 = vmatprep.subr.bf16.mxu0 0
    %348 = vmatpush1.bf16.msra.mxu0 %v275
    %349 = vmatprep.subr.bf16.mxu0 0
    %350 = vmatpush1.bf16.msra.mxu0 %v276
    %351 = vmatprep.subr.bf16.mxu0 0
    %352 = vmatpush1.bf16.msra.mxu0 %v277
    %353 = vmatprep.subr.bf16.mxu0 0
    %354 = vmatpush1.bf16.msra.mxu0 %v278
    %355 = vmatprep.subr.bf16.mxu0 0
    %356 = vmatpush1.bf16.msra.mxu0 %v279
    %357 = vmatprep.subr.bf16.mxu0 0
    %358 = vmatpush1.bf16.msra.mxu0 %v280
    %359 = vmatprep.subr.bf16.mxu0 0
    %360 = vmatpush1.bf16.msra.mxu0 %v281
    %361 = vmatprep.subr.bf16.mxu0 0
    %362 = vmatpush1.bf16.msra.mxu0 %v282
    %363 = vmatprep.mubr.bf16.mxu0 %v68
    %364 = vmatmul.mubr.bf16.gmra.mrb[0].mxu0 %v67
    %v365 = vpop.f32.mrb[0].mxu0
    %v366 = vadd.f32 0.0, %v365
    %v367 = vpop.f32.mrb[0].mxu0
    %v368 = vpop.f32.mrb[0].mxu0
    %v369 = vpop.f32.mrb[0].mxu0
    %370 = vdwg.mxu0
    %371 = vmatprep.subr.bf16.mxu0 0
    %372 = vmatpush1.bf16.msra.mxu0 %v283
    %373 = vmatprep.subr.bf16.mxu0 0
    %374 = vmatpush1.bf16.msra.mxu0 %v284
    %375 = vmatprep.subr.bf16.mxu0 0
    %376 = vmatpush1.bf16.msra.mxu0 %v285
    %377 = vmatprep.subr.bf16.mxu0 0
    %378 = vmatpush1.bf16.msra.mxu0 %v286
    %379 = vmatprep.subr.bf16.mxu0 0
    %380 = vmatpush1.bf16.msra.mxu0 %v287
    %381 = vmatprep.subr.bf16.mxu0 0
    %382 = vmatpush1.bf16.msra.mxu0 %v288
    %383 = vmatprep.subr.bf16.mxu0 0
    %384 = vmatpush1.bf16.msra.mxu0 %v289
    %385 = vmatprep.subr.bf16.mxu0 0
    %386 = vmatpush1.bf16.msra.mxu0 %v290
    %387 = vmatprep.subr.bf16.mxu0 0
    %388 = vmatpush1.bf16.msra.mxu0 %v291
    %389 = vmatprep.subr.bf16.mxu0 0
    %390 = vmatpush1.bf16.msra.mxu0 %v292
    %391 = vmatprep.subr.bf16.mxu0 0
    %392 = vmatpush1.bf16.msra.mxu0 %v293
    %393 = vmatprep.subr.bf16.mxu0 0
    %394 = vmatpush1.bf16.msra.mxu0 %v294
    %395 = vmatprep.subr.bf16.mxu0 0
    %396 = vmatpush1.bf16.msra.mxu0 %v295
    %397 = vmatprep.subr.bf16.mxu0 0
    %398 = vmatpush1.bf16.msra.mxu0 %v296
    %399 = vmatprep.subr.bf16.mxu0 0
    %400 = vmatpush1.bf16.msra.mxu0 %v297
    %401 = vmatprep.subr.bf16.mxu0 0
    %402 = vmatpush1.bf16.msra.mxu0 %v298
    %403 = vmatprep.mubr.bf16.mxu0 %v70
    %404 = vmatmul.mubr.bf16.gmra.mrb[0].mxu0 %v69
    %v405 = vpop.f32.mrb[0].mxu0
    %v406 = vadd.f32 %v366, %v405
    %v407 = vpop.f32.mrb[0].mxu0
    %v408 = vpop.f32.mrb[0].mxu0
    %v409 = vpop.f32.mrb[0].mxu0
    %410 = vdwg.mxu0
    %v415 = vunpack.c.l.b16 %v71
    %v416 = vunpack.c.l.b16 %v72
    %v417 = vunpack.c.l.b16 %v73
    %v418 = vunpack.c.l.b16 %v74
    %v419 = vpack.c.b16 %v416, %v415
    %v420 = vpack.c.b16 %v418, %v417
    %vm423 = vcmask 261120
    %v425 = vsel %vm423, %v62, 0
    %427 = vmatprep.subr.bf16.mxu0 0
    %428 = vmatpush1.bf16.msra.mxu0 %v419
    %429 = vmatprep.subr.bf16.mxu0 0
    %430 = vmatpush1.bf16.msra.mxu0 %v420
    %431 = vmatprep.subr.bf16.mxu0 0
    %432 = vmatpush1.bf16.msra.mxu0 0
    %433 = vmatprep.subr.bf16.mxu0 0
    %434 = vmatpush1.bf16.msra.mxu0 0
    %435 = vmatprep.subr.bf16.mxu0 0
    %436 = vmatpush1.bf16.msra.mxu0 0
    %437 = vmatprep.subr.bf16.mxu0 0
    %438 = vmatpush1.bf16.msra.mxu0 0
    %439 = vmatprep.subr.bf16.mxu0 0
    %440 = vmatpush1.bf16.msra.mxu0 0
    %441 = vmatprep.subr.bf16.mxu0 0
    %442 = vmatpush1.bf16.msra.mxu0 0
    %443 = vmatprep.subr.bf16.mxu0 0
    %444 = vmatpush1.bf16.msra.mxu0 0
    %445 = vmatprep.subr.bf16.mxu0 0
    %446 = vmatpush1.bf16.msra.mxu0 0
    %447 = vmatprep.subr.bf16.mxu0 0
    %448 = vmatpush1.bf16.msra.mxu0 0
    %449 = vmatprep.subr.bf16.mxu0 0
    %450 = vmatpush1.bf16.msra.mxu0 0
    %451 = vmatprep.subr.bf16.mxu0 0
    %452 = vmatpush1.bf16.msra.mxu0 0
    %453 = vmatprep.subr.bf16.mxu0 0
    %454 = vmatpush1.bf16.msra.mxu0 0
    %455 = vmatprep.subr.bf16.mxu0 0
    %456 = vmatpush1.bf16.msra.mxu0 0
    %457 = vmatprep.subr.bf16.mxu0 0
    %458 = vmatpush1.bf16.msra.mxu0 0
    %459 = vmatprep.mubr.bf16.mxu0 0
    %460 = vmatmul.mubr.bf16.gmra.mrb[0].mxu0 %v425
    %v461 = vpop.f32.mrb[0].mxu0
    %v462 = vadd.f32 %v406, %v461
    %v463 = vpop.f32.mrb[0].mxu0
    %v464 = vpop.f32.mrb[0].mxu0
    %v465 = vpop.f32.mrb[0].mxu0
    %466 = vdwg.mxu0
    %v467 = vld [vmem:[%s4] sm:$0x1]
    %v469 = vlaneseq
    %v470 = vshrl.u32 %v469, 7
    %v471 = vsub.s32 0, %v470
    %v472 = vrot.slane %v467, %v471
    %v474 = vadd.f32 %v462, %v472
    %vm475 = vcmp.gt.f32.partialorder %v474, 0.0
    %v476 = vmul.f32 %v474, 0.2
    %v477 = vsel %vm475, %v474, %v476
    %v478 = vpack.c.bf16 %v477, %v477
    %v479 = vld [vmem:[%s5] sm:$0xf]
    %v480 = vld [vmem:[%s5 + $0x4] sm:$0xf]
    %v481 = vld [vmem:[%s5 + $0x8] sm:$0xf]
    %v482 = vld [vmem:[%s5 + $0xc] sm:$0xf]
    %v483 = vld [vmem:[%s5 + $0x10] sm:$0xf]
    %v484 = vld [vmem:[%s5 + $0x14] sm:$0xf]
    %v485 = vld [vmem:[%s5 + $0x18] sm:$0xf]
    %v486 = vld [vmem:[%s5 + $0x1c] sm:$0xf]
    %v487 = vld [vmem:[%s5 + $0x20] sm:$0xf]
    %v488 = vld [vmem:[%s5 + $0x24] sm:$0xf]
    %v489 = vld [vmem:[%s5 + $0x28] sm:$0xf]
    %v490 = vld [vmem:[%s5 + $0x2c] sm:$0xf]
    %v491 = vld [vmem:[%s5 + $0x30] sm:$0xf]
    %v492 = vld [vmem:[%s5 + $0x34] sm:$0xf]
    %v493 = vld [vmem:[%s5 + $0x38] sm:$0xf]
    %v494 = vld [vmem:[%s5 + $0x3c] sm:$0xf]
    %v495 = vld [vmem:[%s6] sm:$0x1]
    %v497 = vlaneseq
    %v498 = vshrl.u32 %v497, 7
    %v499 = vsub.s32 0, %v498
    %v500 = vrot.slane %v495, %v499
    %v518 = vunpack.c.l.b16 %v479
    %v519 = vunpack.c.l.b16 %v480
    %v520 = vunpack.c.l.b16 %v481
    %v521 = vunpack.c.l.b16 %v482
    %v522 = vunpack.c.l.b16 %v483
    %v523 = vunpack.c.l.b16 %v484
    %v524 = vunpack.c.l.b16 %v485
    %v525 = vunpack.c.l.b16 %v486
    %v526 = vunpack.c.l.b16 %v487
    %v527 = vunpack.c.l.b16 %v488
    %v528 = vunpack.c.l.b16 %v489
    %v529 = vunpack.c.l.b16 %v490
    %v530 = vunpack.c.l.b16 %v491
    %v531 = vunpack.c.l.b16 %v492
    %v532 = vunpack.c.l.b16 %v493
    %v533 = vunpack.c.l.b16 %v494
    %v534 = vpack.c.b16 %v519, %v518
    %v535 = vpack.c.b16 %v521, %v520
    %v536 = vpack.c.b16 %v523, %v522
    %v537 = vpack.c.b16 %v525, %v524
    %v538 = vpack.c.b16 %v527, %v526
    %v539 = vpack.c.b16 %v529, %v528
    %v540 = vpack.c.b16 %v531, %v530
    %v541 = vpack.c.b16 %v533, %v532
    %550 = vmatprep.subr.bf16.mxu0 0
    %551 = vmatpush1.bf16.msra.mxu0 %v534
    %552 = vmatprep.subr.bf16.mxu0 0
    %553 = vmatpush1.bf16.msra.mxu0 %v535
    %554 = vmatprep.subr.bf16.mxu0 0
    %555 = vmatpush1.bf16.msra.mxu0 %v536
    %556 = vmatprep.subr.bf16.mxu0 0
    %557 = vmatpush1.bf16.msra.mxu0 %v537
    %558 = vmatprep.subr.bf16.mxu0 0
    %559 = vmatpush1.bf16.msra.mxu0 %v538
    %560 = vmatprep.subr.bf16.mxu0 0
    %561 = vmatpush1.bf16.msra.mxu0 %v539
    %562 = vmatprep.subr.bf16.mxu0 0
    %563 = vmatpush1.bf16.msra.mxu0 %v540
    %564 = vmatprep.subr.bf16.mxu0 0
    %565 = vmatpush1.bf16.msra.mxu0 %v541
    %566 = vmatprep.subr.bf16.mxu0 0
    %567 = vmatpush1.bf16.msra.mxu0 0
    %568 = vmatprep.subr.bf16.mxu0 0
    %569 = vmatpush1.bf16.msra.mxu0 0
    %570 = vmatprep.subr.bf16.mxu0 0
    %571 = vmatpush1.bf16.msra.mxu0 0
    %572 = vmatprep.subr.bf16.mxu0 0
    %573 = vmatpush1.bf16.msra.mxu0 0
    %574 = vmatprep.subr.bf16.mxu0 0
    %575 = vmatpush1.bf16.msra.mxu0 0
    %576 = vmatprep.subr.bf16.mxu0 0
    %577 = vmatpush1.bf16.msra.mxu0 0
    %578 = vmatprep.subr.bf16.mxu0 0
    %579 = vmatpush1.bf16.msra.mxu0 0
    %580 = vmatprep.subr.bf16.mxu0 0
    %581 = vmatpush1.bf16.msra.mxu0 0
    %582 = vmatprep.mubr.bf16.mxu0 0
    %583 = vmatmul.mubr.bf16.gmra.mrb[0].mxu0 %v478
    %v584 = vpop.f32.mrb[0].mxu0
    %v585 = vadd.f32 %v500, %v584
    %v586 = vpop.f32.mrb[0].mxu0
    %v587 = vpop.f32.mrb[0].mxu0
    %v588 = vpop.f32.mrb[0].mxu0
    %589 = vdwg.mxu0
    %vm590 = vcmp.gt.f32.partialorder %v585, 0.0
    %v591 = vmul.f32 %v585, 0.2
    %v592 = vsel %vm590, %v585, %v591
    %v593 = vld [vmem:[%s7] sm:$0x1]
    %v594 = vunpack.c.l.bf16 %v593
    %v595 = vlaneseq
    %v596 = vshrl.u32 %v595, 7
    %v597 = vsub.s32 0, %v596
    %v598 = vrot.slane %v594, %v597
    %v599 = vmul.f32 %v592, %v598
    %vm600 = vcmask 523264
    %v601 = vsel %vm600, %v599, 0.0
    %602 = vadd.xlane.f32.xlu0 %v601
    %v603 = vpop.xlane.xlu0 %602
    %v604 = vld [vmem:[#allocation2] sm:$0x1]
    %v606 = vlaneseq
    %v607 = vshrl.u32 %v606, 7
    %v608 = vsub.s32 0, %v607
    %v609 = vrot.slane %v604, %v608
    %v611 = vadd.f32 %v603, %v609
    %vm612 = vcmask 7168
    %613 = vst.msk [vmem:[%s9] sm:$0xff] %vm612, %v611
    // Predicated region
    $region46: #{tpu_custom_call.1} parent=1 // pred_check
      _
    $region47: #{tpu_custom_call.1} parent=1 // pred_check_branch
      %615 = sbr.rel (0) target = $region49
    $region48: #{tpu_custom_call.1} parent=1 // pred_region
      _
    $region49: #{tpu_custom_call.1} parent=1 // pred_fallthru
      _
    // Predicated region
    $region50: #{tpu_custom_call.1} parent=1 // pred_check
      _
    $region51: #{tpu_custom_call.1} parent=1 // pred_check_branch
      %617 = sbr.rel (0) target = $region53
    $region52: #{tpu_custom_call.1} parent=1 // pred_region
      _
    $region53: #{tpu_custom_call.1} parent=1 // pred_fallthru
      _
    %618 = vsyncpa [#allocation4], 1
    %619 = vsyncpa [#allocation6], 1

</llo_original>
